<compile_context>
chip_gen: v6e
topology: v6e:2x2x1
jax: 0.10.0
libtpu: 0.0.40
codegen_flags: <defaults>
</compile_context>

<pallas_src>
import jax
import jax.numpy as jnp
from jax.experimental import pallas as pl
from jax.experimental.pallas import tpu as pltpu


_LANES = 1024          # lane (last-dim) width of the flattened slab
_MAX_TILE_ROWS = 512   # (512, 1024) f32 block = 2 MiB per input per step


def _round_up(x: int, m: int) -> int:
    return (x + m - 1) // m * m


def _mse_partial_kernel(a_ref, b_ref, out_ref):
    """One row tile: out[0] = per-vreg-group sum of (a - b)^2, shape (8, LANES)."""
    a = a_ref[...].astype(jnp.float32)
    b = b_ref[...].astype(jnp.float32)
    d = a - b
    sq = d * d                                    # (tile_r, cols) f32
    tr, tc = sq.shape
    # Reduce over groups of 8 rows (whole vregs): pure VPU adds, hidden under
    # the input DMAs. No cross-lane (XLU) work and no scalar RMW in the kernel.
    out_ref[0] = jnp.sum(sq.reshape(tr // 8, 8, tc), axis=0)


def mse_loss(obs_hat: jax.Array, obs: jax.Array) -> jax.Array:
    """Pallas implementation of MSELoss.forward (sum over C,H,W, mean over B,L)."""
    assert obs_hat.shape == obs.shape, "obs_hat and obs must have the same shape"
    B, L = obs_hat.shape[0], obs_hat.shape[1]
    n = obs_hat.size

    cols = _LANES
    rows = pl.cdiv(n, cols)
    tile_r = min(_MAX_TILE_ROWS, _round_up(rows, 16))   # multiple of 16 (bf16-safe)
    num_tiles = pl.cdiv(rows, tile_r)
    padded_rows = num_tiles * tile_r
    padded_n = padded_rows * cols

    a = obs_hat.reshape(-1)
    b = obs.reshape(-1)
    if padded_n != n:
        # Zero padding contributes 0 to the sum of squared differences.
        # (Costs one extra HBM pass; only taken for non-tile-aligned sizes.)
        a = jnp.pad(a, (0, padded_n - n))
        b = jnp.pad(b, (0, padded_n - n))
    a2d = a.reshape(padded_rows, cols)
    b2d = b.reshape(padded_rows, cols)

    itemsize = jnp.dtype(obs_hat.dtype).itemsize
    cost = pl.CostEstimate(
        flops=3 * padded_n,                                   # sub + mul + add
        bytes_accessed=2 * padded_n * itemsize + num_tiles * 8 * cols * 4,
        transcendentals=0,
    )

    partials = pl.pallas_call(
        _mse_partial_kernel,
        out_shape=jax.ShapeDtypeStruct((num_tiles, 8, cols), jnp.float32),
        grid_spec=pltpu.PrefetchScalarGridSpec(
            num_scalar_prefetch=0,
            grid=(num_tiles,),
            in_specs=[
                pl.BlockSpec((tile_r, cols), lambda i: (i, 0)),
                pl.BlockSpec((tile_r, cols), lambda i: (i, 0)),
            ],
            out_specs=pl.BlockSpec((1, 8, cols), lambda i: (i, 0, 0)),
        ),
        compiler_params=pltpu.CompilerParams(
            dimension_semantics=("parallel",),       # uses both TCs on v7x
            vmem_limit_bytes=32 * 1024 * 1024,       # headroom for big blocks (v5e)
        ),
        cost_estimate=cost,
    )(a2d, b2d)

    # Tiny final reduction (<= ~1.6% of the input bytes) done in plain JAX.
    total = jnp.sum(partials, dtype=jnp.float32)
    return total / jnp.float32(B * L)


if __name__ == "__main__":
    key = jax.random.PRNGKey(0)
    k1, k2 = jax.random.split(key)

    # Small shapes consistent with the module's (B, L, C, H, W) inputs.
    B, L, C, H, W = 2, 8, 4, 16, 16
    obs_hat = jax.random.normal(k1, (B, L, C, H, W), dtype=jnp.float32)
    obs = jax.random.normal(k2, (B, L, C, H, W), dtype=jnp.float32)

    loss = jax.jit(mse_loss)(obs_hat, obs)
    jax.block_until_ready(loss)

    # Reference check in plain JAX.
    ref = jnp.mean(jnp.sum((obs_hat - obs) ** 2, axis=(2, 3, 4)))
    assert jnp.allclose(loss, ref, rtol=1e-5, atol=1e-5), (loss, ref)

    # Also exercise the non-tile-aligned + bf16 path.
    obs_hat2 = jax.random.normal(k1, (2, 3, 3, 17, 11), dtype=jnp.bfloat16)
    obs2 = jax.random.normal(k2, (2, 3, 3, 17, 11), dtype=jnp.bfloat16)
    loss2 = jax.jit(mse_loss)(obs_hat2, obs2)
    jax.block_until_ready(loss2)
    ref2 = jnp.mean(jnp.sum(
        (obs_hat2.astype(jnp.float32) - obs2.astype(jnp.float32)) ** 2,
        axis=(2, 3, 4)))
    assert jnp.allclose(loss2, ref2, rtol=1e-3, atol=1e-3), (loss2, ref2)

    print("KERNEL_OK")
</pallas_src>

<mosaic_0001>
module attributes {stable_mosaic.version = 11 : i64} {
  func.func @_mse_partial_kernel(%arg0: i32, %arg1: memref<16x1024xf32, #tpu.memory_space<vmem>>, %arg2: memref<16x1024xf32, #tpu.memory_space<vmem>>, %arg3: memref<1x8x1024xf32, #tpu.memory_space<vmem>>) attributes {dimension_semantics = [#tpu.dimension_semantics<parallel>], iteration_bounds = array<i64: 1>, scalar_prefetch = 0 : i64, scratch_operands = 0 : i64, tpu.core_type = #tpu.core_type<tc>, window_params = [{transform_indices = @transform_0, window_bounds = array<i64: 16, 1024>}, {transform_indices = @transform_1, window_bounds = array<i64: 16, 1024>}, {transform_indices = @transform_2, window_bounds = array<i64: 1, 8, 1024>}]} {
    %c0 = arith.constant 0 : index
    %c0_0 = arith.constant 0 : index
    %0 = vector.load %arg1[%c0, %c0_0] : memref<16x1024xf32, #tpu.memory_space<vmem>>, vector<16x1024xf32>
    %c0_1 = arith.constant 0 : index
    %c0_2 = arith.constant 0 : index
    %1 = vector.load %arg2[%c0_1, %c0_2] : memref<16x1024xf32, #tpu.memory_space<vmem>>, vector<16x1024xf32>
    %2 = arith.subf %0, %1 : vector<16x1024xf32>
    %3 = arith.mulf %2, %2 : vector<16x1024xf32>
    %4 = vector.shape_cast %3 : vector<16x1024xf32> to vector<2x8x1024xf32>
    %cst = arith.constant dense<0.000000e+00> : vector<8x1024xf32>
    %5 = vector.multi_reduction <add>, %4, %cst [0] : vector<2x8x1024xf32> to vector<8x1024xf32>
    %c0_3 = arith.constant 0 : index
    %c0_4 = arith.constant 0 : index
    %c0_5 = arith.constant 0 : index
    %6 = vector.load %arg3[%c0_3, %c0_4, %c0_5] : memref<1x8x1024xf32, #tpu.memory_space<vmem>>, vector<1x8x1024xf32>
    %7 = vector.shape_cast %6 : vector<1x8x1024xf32> to vector<8x1024xf32>
    %8 = vector.shape_cast %5 : vector<8x1024xf32> to vector<1x8x1024xf32>
    tpu.vector_store %arg3[%c0_3, %c0_4, %c0_5], %8 {strides = array<i32>} : memref<1x8x1024xf32, #tpu.memory_space<vmem>>, vector<1x8x1024xf32>,
    return
  }
  func.func @transform_0(%arg0: i32) -> (i32, i32) {
    %c0_i32 = arith.constant 0 : i32
    %c0_i32_0 = arith.constant 0 : i32
    return %arg0, %c0_i32 : i32, i32
  }
  func.func @transform_1(%arg0: i32) -> (i32, i32) {
    %c0_i32 = arith.constant 0 : i32
    %c0_i32_0 = arith.constant 0 : i32
    return %arg0, %c0_i32 : i32, i32
  }
  func.func @transform_2(%arg0: i32) -> (i32, i32, i32) {
    %c0_i32 = arith.constant 0 : i32
    %c0_i32_0 = arith.constant 0 : i32
    %c0_i32_1 = arith.constant 0 : i32
    return %arg0, %c0_i32, %c0_i32_0 : i32, i32, i32
  }
}

</mosaic_0001>

<llo_original>
// kernel: mse_loss.1
$region0: #{mse_loss.1}
  #allocation0 [shape = 'u32[]', space=smem, size = 0x4, offset = 0x4, fixed_abs, tag = 'smem constant byte address 0x4 - core index']
  #allocation1 [shape = 'u32[144,128]{1,0:T(1,128)}', space=vmem, size = 0x12000, scoped, tag = 'internal scratch']
  %s0 = inlined_call_operand.vmem [shape: f32[16,1024], index: 0, kind: input, shape index: {}]
  %s1 = inlined_call_operand.vmem [shape: f32[16,1024], index: 1, kind: input, shape index: {}]
  %s2 = inlined_call_operand.vmem [shape: f32[1,8,1024], index: 2, kind: output, shape index: {}]
  %s3 = sld [smem:[#allocation0]]
  $region18: #{mse_loss.1} parent=0
    _
  %s5 = ssub.s32 1, %s3
  %s6 = scalar_select 0, %s5, %s3
  // Predicated region
  $region2: #{mse_loss.1} parent=0 // pred_check
    _
  $region3: #{mse_loss.1} parent=0 // pred_check_branch
    %8 = sbr.rel (0) target = $region5
  $region4: #{mse_loss.1} parent=0 // pred_region
    _
  $region5: #{mse_loss.1} parent=0 // pred_fallthru
    _
  // Predicated region
  $region6: #{mse_loss.1} parent=0 // pred_check
    _
  $region7: #{mse_loss.1} parent=0 // pred_check_branch
    %10 = sbr.rel (0) target = $region9
  $region8: #{mse_loss.1} parent=0 // pred_region
    _
  $region9: #{mse_loss.1} parent=0 // pred_fallthru
    _
  %v11 = vld [vmem:[%s0] sm:$0xff]
  %v12 = vld [vmem:[%s0 + $0x8] sm:$0xff]
  %v13 = vld [vmem:[%s0 + $0x10] sm:$0xff]
  %v14 = vld [vmem:[%s0 + $0x18] sm:$0xff]
  %v15 = vld [vmem:[%s0 + $0x20] sm:$0xff]
  %v16 = vld [vmem:[%s0 + $0x28] sm:$0xff]
  %v17 = vld [vmem:[%s0 + $0x30] sm:$0xff]
  %v18 = vld [vmem:[%s0 + $0x38] sm:$0xff]
  %v19 = vld [vmem:[%s0 + $0x40] sm:$0xff]
  %v20 = vld [vmem:[%s0 + $0x48] sm:$0xff]
  %v21 = vld [vmem:[%s0 + $0x50] sm:$0xff]
  %v22 = vld [vmem:[%s0 + $0x58] sm:$0xff]
  %v23 = vld [vmem:[%s0 + $0x60] sm:$0xff]
  %v24 = vld [vmem:[%s0 + $0x68] sm:$0xff]
  %v25 = vld [vmem:[%s0 + $0x70] sm:$0xff]
  %v26 = vld [vmem:[%s0 + $0x78] sm:$0xff]
  %v27 = vld [vmem:[%s1] sm:$0xff]
  %v28 = vld [vmem:[%s1 + $0x8] sm:$0xff]
  %v29 = vld [vmem:[%s1 + $0x10] sm:$0xff]
  %v30 = vld [vmem:[%s1 + $0x18] sm:$0xff]
  %v31 = vld [vmem:[%s1 + $0x20] sm:$0xff]
  %v32 = vld [vmem:[%s1 + $0x28] sm:$0xff]
  %v33 = vld [vmem:[%s1 + $0x30] sm:$0xff]
  %v34 = vld [vmem:[%s1 + $0x38] sm:$0xff]
  %v35 = vld [vmem:[%s1 + $0x40] sm:$0xff]
  %v36 = vld [vmem:[%s1 + $0x48] sm:$0xff]
  %v37 = vld [vmem:[%s1 + $0x50] sm:$0xff]
  %v38 = vld [vmem:[%s1 + $0x58] sm:$0xff]
  %v39 = vld [vmem:[%s1 + $0x60] sm:$0xff]
  %v40 = vld [vmem:[%s1 + $0x68] sm:$0xff]
  %v41 = vld [vmem:[%s1 + $0x70] sm:$0xff]
  %v42 = vld [vmem:[%s1 + $0x78] sm:$0xff]
  %v43 = vsub.f32 %v11, %v27
  %v44 = vsub.f32 %v12, %v28
  %v45 = vsub.f32 %v13, %v29
  %v46 = vsub.f32 %v14, %v30
  %v47 = vsub.f32 %v15, %v31
  %v48 = vsub.f32 %v16, %v32
  %v49 = vsub.f32 %v17, %v33
  %v50 = vsub.f32 %v18, %v34
  %v51 = vsub.f32 %v19, %v35
  %v52 = vsub.f32 %v20, %v36
  %v53 = vsub.f32 %v21, %v37
  %v54 = vsub.f32 %v22, %v38
  %v55 = vsub.f32 %v23, %v39
  %v56 = vsub.f32 %v24, %v40
  %v57 = vsub.f32 %v25, %v41
  %v58 = vsub.f32 %v26, %v42
  %v59 = vmul.f32 %v43, %v43
  %v60 = vmul.f32 %v44, %v44
  %v61 = vmul.f32 %v45, %v45
  %v62 = vmul.f32 %v46, %v46
  %v63 = vmul.f32 %v47, %v47
  %v64 = vmul.f32 %v48, %v48
  %v65 = vmul.f32 %v49, %v49
  %v66 = vmul.f32 %v50, %v50
  %v67 = vmul.f32 %v51, %v51
  %v68 = vmul.f32 %v52, %v52
  %v69 = vmul.f32 %v53, %v53
  %v70 = vmul.f32 %v54, %v54
  %v71 = vmul.f32 %v55, %v55
  %v72 = vmul.f32 %v56, %v56
  %v73 = vmul.f32 %v57, %v57
  %v74 = vmul.f32 %v58, %v58
  %v75 = vadd.f32 %v59, %v67
  %v76 = vadd.f32 %v60, %v68
  %v77 = vadd.f32 %v61, %v69
  %v78 = vadd.f32 %v62, %v70
  %v79 = vadd.f32 %v63, %v71
  %v80 = vadd.f32 %v64, %v72
  %v81 = vadd.f32 %v65, %v73
  %v82 = vadd.f32 %v66, %v74
  %83 = vst [vmem:[%s2] sm:$0xff] %v75
  %84 = vst [vmem:[%s2 + $0x8] sm:$0xff] %v76
  %85 = vst [vmem:[%s2 + $0x10] sm:$0xff] %v77
  %86 = vst [vmem:[%s2 + $0x18] sm:$0xff] %v78
  %87 = vst [vmem:[%s2 + $0x20] sm:$0xff] %v79
  %88 = vst [vmem:[%s2 + $0x28] sm:$0xff] %v80
  %89 = vst [vmem:[%s2 + $0x30] sm:$0xff] %v81
  %90 = vst [vmem:[%s2 + $0x38] sm:$0xff] %v82
  // Predicated region
  $region10: #{mse_loss.1} parent=0 // pred_check
    _
  $region11: #{mse_loss.1} parent=0 // pred_check_branch
    %92 = sbr.rel (0) target = $region13
  $region12: #{mse_loss.1} parent=0 // pred_region
    _
  $region13: #{mse_loss.1} parent=0 // pred_fallthru
    _
  // Predicated region
  $region14: #{mse_loss.1} parent=0 // pred_check
    _
  $region15: #{mse_loss.1} parent=0 // pred_check_branch
    %94 = sbr.rel (0) target = $region17
  $region16: #{mse_loss.1} parent=0 // pred_region
    _
  $region17: #{mse_loss.1} parent=0 // pred_fallthru
    _

</llo_original>
